<compile_context>
chip_gen: v6e
topology: v6e:2x2x1
jax: 0.10.0
libtpu: 0.0.40
codegen_flags: <defaults>
</compile_context>

<pallas_src>
import jax
import jax.numpy as jnp
from jax.experimental import pallas as pl
from jax.experimental.pallas import tpu as pltpu


def _round_up(n, m):
    return (n + m - 1) // m * m


def _autoencoder_kernel(x_ref, we_ref, be_ref, wd_ref, bd_ref, o_ref):
    # x arrives in its native dtype; cast to the MXU compute dtype in-kernel.
    x = x_ref[...].astype(we_ref.dtype)
    # encoder: h = relu(x @ W_enc + b_enc)  -- MXU matmul, f32 accumulation.
    h = jnp.dot(x, we_ref[...], preferred_element_type=jnp.float32)
    h = jnp.maximum(h + be_ref[...], 0.0)            # f32 epilogue on the VPU
    # decoder (this output-column tile): y = h @ W_dec[:, j_tile] + b_dec[j_tile]
    y = jnp.dot(h.astype(wd_ref.dtype), wd_ref[...],
                preferred_element_type=jnp.float32)
    o_ref[...] = (y + bd_ref[...]).astype(o_ref.dtype)


def prepare_autoencoder_params(w_enc, b_enc, w_dec, b_dec, *,
                               compute_dtype=jnp.bfloat16):
    """One-time parameter prep (call once, NOT per forward).

    Casts weights to the MXU compute dtype and zero-pads the hidden dim up to
    a multiple of 128 (lane-dense h tile; full reduction depth for the
    decoder). Biases stay f32 for the VPU epilogue.
    """
    D, Hid = w_enc.shape
    Hid_p = _round_up(Hid, 128)
    we = jnp.zeros((D, Hid_p), compute_dtype).at[:, :Hid].set(
        w_enc.astype(compute_dtype))
    be = jnp.zeros((1, Hid_p), jnp.float32).at[:, :Hid].set(
        b_enc.reshape(1, Hid).astype(jnp.float32))
    wd = jnp.zeros((Hid_p, D), compute_dtype).at[:Hid, :].set(
        w_dec.astype(compute_dtype))
    bd = b_dec.reshape(1, D).astype(jnp.float32)
    return we, be, wd, bd


def _pick_tn(D, target):
    """Largest multiple of 128 that divides D and is <= target (else D)."""
    if D % 128 != 0:
        return D
    tn = max(128, min(target, D))
    tn -= tn % 128
    while D % tn != 0:
        tn -= 128
    return tn


def autoencoder_forward(x_nchw, params, *, block_m=512, block_n=512,
                        output_dtype=None):
    """Fused forward: relu(flatten(x) @ W_enc + b_enc) @ W_dec + b_dec.

    x_nchw: [B, C, H, W] (any float dtype; cast to bf16 inside the kernel).
    params: output of prepare_autoencoder_params (pre-cast, Hid-padded).
    Returns [B, C, H, W] in x's dtype (or `output_dtype` if given).
    """
    we, be, wd, bd = params
    B, C, H, W = x_nchw.shape
    D = C * H * W
    Hid_p = we.shape[1]
    assert we.shape[0] == D and wd.shape == (Hid_p, D)
    out_dtype = x_nchw.dtype if output_dtype is None else output_dtype

    x2d = x_nchw.reshape(B, D)

    # Batch tile: 16-row aligned (bf16 sublane packing of the in-kernel casts).
    tm = min(_round_up(block_m, 16), _round_up(B, 16))
    Bp = _round_up(B, tm)
    if Bp != B:
        x2d = jnp.pad(x2d, ((0, Bp - B), (0, 0)))   # pad rows sliced off below

    tn = _pick_tn(D, block_n)                        # decoder output-col tile
    n_i, n_j = Bp // tm, D // tn

    x_bytes = x2d.dtype.itemsize
    w_bytes = we.dtype.itemsize
    o_bytes = jnp.dtype(out_dtype).itemsize

    # Explicit VMEM budget (double-buffered blocks + f32 temps), clamped so the
    # same config stays safe on v7x's 64 MiB VMEM.
    vmem_est = (
        2 * D * Hid_p * w_bytes          # W_enc (constant block -> DMA'd once)
        + 2 * Hid_p * 4                  # b_enc
        + 2 * tm * D * x_bytes           # x tiles (double-buffered)
        + 2 * Hid_p * tn * w_bytes       # W_dec column tiles
        + 2 * tn * 4                     # b_dec tiles
        + 2 * tm * tn * o_bytes          # out tiles
        + tm * Hid_p * 4 + tm * tn * 4   # h / y f32 intermediates
    )
    vmem_limit = int(min(max(2 * vmem_est + (4 << 20), 32 << 20), 64 << 20))

    bytes_accessed = int(
        Bp * D * x_bytes                 # x read once (constant over j)
        + D * Hid_p * w_bytes            # W_enc read once
        + n_i * Hid_p * D * w_bytes      # W_dec re-read per batch tile
        + (Hid_p + D) * 4                # biases
        + Bp * D * o_bytes               # output written once
    )
    flops = int(2 * Bp * D * Hid_p * (n_j + 1))  # encoder recomputed per j

    call = pl.pallas_call(
        _autoencoder_kernel,
        out_shape=jax.ShapeDtypeStruct((Bp, D), out_dtype),
        grid_spec=pltpu.PrefetchScalarGridSpec(
            num_scalar_prefetch=0,
            grid=(n_i, n_j),                                   # (batch, out-col)
            in_specs=[
                pl.BlockSpec((tm, D), lambda i, j: (i, 0)),     # x (per-i)
                pl.BlockSpec((D, Hid_p), lambda i, j: (0, 0)),  # W_enc (const)
                pl.BlockSpec((1, Hid_p), lambda i, j: (0, 0)),  # b_enc (const)
                pl.BlockSpec((Hid_p, tn), lambda i, j: (0, j)),  # W_dec (per-j)
                pl.BlockSpec((1, tn), lambda i, j: (0, j)),      # b_dec (per-j)
            ],
            out_specs=pl.BlockSpec((tm, tn), lambda i, j: (i, j)),
        ),
        compiler_params=pltpu.CompilerParams(
            dimension_semantics=("parallel", "parallel"),       # megacore on v7x
            vmem_limit_bytes=vmem_limit),
        cost_estimate=pl.CostEstimate(
            flops=flops, transcendentals=0, bytes_accessed=bytes_accessed),
    )
    out2d = call(x2d, we, be, wd, bd)
    return out2d[:B].reshape(B, C, H, W)


# ----------------------------- references ---------------------------------

def _reference_f32(x_nchw, w_enc, b_enc, w_dec, b_dec):
    B = x_nchw.shape[0]
    x2d = x_nchw.reshape(B, -1).astype(jnp.float32)
    h = jnp.maximum(x2d @ w_enc.astype(jnp.float32) + b_enc, 0.0)
    y = h @ w_dec.astype(jnp.float32) + b_dec
    return y.reshape(x_nchw.shape)


def _reference_matched(x_nchw, w_enc, b_enc, w_dec, b_dec,
                       compute_dtype=jnp.bfloat16):
    # Same rounding as the kernel: bf16 MXU inputs, f32 accumulation/epilogue.
    B = x_nchw.shape[0]
    x2d = x_nchw.reshape(B, -1).astype(compute_dtype)
    h = jnp.dot(x2d, w_enc.astype(compute_dtype),
                preferred_element_type=jnp.float32)
    h = jnp.maximum(h + b_enc.astype(jnp.float32), 0.0)
    y = jnp.dot(h.astype(compute_dtype), w_dec.astype(compute_dtype),
                preferred_element_type=jnp.float32)
    y = y + b_dec.astype(jnp.float32)
    return y.reshape(x_nchw.shape).astype(x_nchw.dtype)


if __name__ == "__main__":
    # Small deterministic shapes consistent with an image autoencoder.
    B, C, H, W = 2, 4, 16, 16
    D = C * H * W          # 1024
    HID = 32               # latent dim (zero-padded to 128 at param-prep time)

    key = jax.random.PRNGKey(0)
    kx, ke, kbe, kd, kbd = jax.random.split(key, 5)

    x = jax.random.normal(kx, (B, C, H, W), dtype=jnp.float32)
    # Deterministic synthetic parameters (stand-in for a checkpoint load).
    w_enc = jax.random.normal(ke, (D, HID), dtype=jnp.float32) * (1.0 / jnp.sqrt(D))
    b_enc = jax.random.normal(kbe, (HID,), dtype=jnp.float32) * 0.01
    w_dec = jax.random.normal(kd, (HID, D), dtype=jnp.float32) * (1.0 / jnp.sqrt(HID))
    b_dec = jax.random.normal(kbd, (D,), dtype=jnp.float32) * 0.01

    # One-time parameter prep (cast to bf16 + Hid padding), outside the
    # per-call path.
    params = prepare_autoencoder_params(w_enc, b_enc, w_dec, b_dec)

    out = autoencoder_forward(x, params)
    out = jax.block_until_ready(out)
    assert out.shape == (B, C, H, W), out.shape

    # Tight check vs. a precision-matched (bf16-in / f32-accumulate) reference.
    ref_m = _reference_matched(x, w_enc, b_enc, w_dec, b_dec)
    assert jnp.allclose(out, ref_m, atol=2e-3, rtol=2e-3), \
        "mismatch vs matched-precision reference"

    # Loose sanity check vs. the full-f32 reference (bf16 rounding error only).
    ref_f32 = _reference_f32(x, w_enc, b_enc, w_dec, b_dec)
    assert jnp.allclose(out, ref_f32, atol=5e-2, rtol=5e-2), \
        "mismatch vs f32 reference"

    print("KERNEL_OK")
</pallas_src>

<mosaic_0001>
module attributes {stable_mosaic.version = 11 : i64} {
  func.func @_autoencoder_kernel(%arg0: i32, %arg1: i32, %arg2: memref<16x1024xf32, #tpu.memory_space<vmem>>, %arg3: memref<1024x128xbf16, #tpu.memory_space<vmem>>, %arg4: memref<1x128xf32, #tpu.memory_space<vmem>>, %arg5: memref<128x512xbf16, #tpu.memory_space<vmem>>, %arg6: memref<1x512xf32, #tpu.memory_space<vmem>>, %arg7: memref<16x512xf32, #tpu.memory_space<vmem>>) attributes {dimension_semantics = [#tpu.dimension_semantics<parallel>, #tpu.dimension_semantics<parallel>], iteration_bounds = array<i64: 1, 2>, scalar_prefetch = 0 : i64, scratch_operands = 0 : i64, tpu.core_type = #tpu.core_type<tc>, window_params = [{transform_indices = @transform_0, window_bounds = array<i64: 16, 1024>}, {pipeline_mode = #tpu.pipeline_mode<synchronous>, transform_indices = @transform_1, window_bounds = array<i64: 1024, 128>}, {pipeline_mode = #tpu.pipeline_mode<synchronous>, transform_indices = @transform_2, window_bounds = array<i64: 1, 128>}, {transform_indices = @transform_3, window_bounds = array<i64: 128, 512>}, {transform_indices = @transform_4, window_bounds = array<i64: 1, 512>}, {transform_indices = @transform_5, window_bounds = array<i64: 16, 512>}]} {
    %c0 = arith.constant 0 : index
    %c0_0 = arith.constant 0 : index
    %0 = vector.load %arg2[%c0, %c0_0] : memref<16x1024xf32, #tpu.memory_space<vmem>>, vector<16x1024xf32>
    %1 = arith.truncf %0 : vector<16x1024xf32> to vector<16x1024xbf16>
    %c0_1 = arith.constant 0 : index
    %c0_2 = arith.constant 0 : index
    %2 = vector.load %arg3[%c0_1, %c0_2] : memref<1024x128xbf16, #tpu.memory_space<vmem>>, vector<1024x128xbf16>
    %cst = arith.constant dense<0.000000e+00> : vector<16x128xf32>
    %3 = tpu.matmul %1, %2, %cst {dimension_numbers = #tpu.dot_dimension_numbers<[1], [0], [0], [1], [0, 0, 1, 1], [], []>} : vector<16x1024xbf16>, vector<1024x128xbf16>, vector<16x128xf32> -> vector<16x128xf32>
    %c0_3 = arith.constant 0 : index
    %c0_4 = arith.constant 0 : index
    %4 = vector.load %arg4[%c0_3, %c0_4] : memref<1x128xf32, #tpu.memory_space<vmem>>, vector<1x128xf32>
    %5 = vector.broadcast %4 : vector<1x128xf32> to vector<16x128xf32>
    %6 = arith.addf %3, %5 : vector<16x128xf32>
    %cst_5 = arith.constant 0.000000e+00 : f32
    %7 = vector.broadcast %cst_5 : f32 to vector<16x128xf32>
    %8 = arith.maximumf %6, %7 : vector<16x128xf32>
    %9 = arith.truncf %8 : vector<16x128xf32> to vector<16x128xbf16>
    %c0_6 = arith.constant 0 : index
    %c0_7 = arith.constant 0 : index
    %10 = vector.load %arg5[%c0_6, %c0_7] : memref<128x512xbf16, #tpu.memory_space<vmem>>, vector<128x512xbf16>
    %cst_8 = arith.constant dense<0.000000e+00> : vector<16x512xf32>
    %11 = tpu.matmul %9, %10, %cst_8 {dimension_numbers = #tpu.dot_dimension_numbers<[1], [0], [0], [1], [0, 0, 1, 1], [], []>} : vector<16x128xbf16>, vector<128x512xbf16>, vector<16x512xf32> -> vector<16x512xf32>
    %c0_9 = arith.constant 0 : index
    %c0_10 = arith.constant 0 : index
    %12 = vector.load %arg6[%c0_9, %c0_10] : memref<1x512xf32, #tpu.memory_space<vmem>>, vector<1x512xf32>
    %13 = vector.broadcast %12 : vector<1x512xf32> to vector<16x512xf32>
    %14 = arith.addf %11, %13 : vector<16x512xf32>
    %c0_11 = arith.constant 0 : index
    %c0_12 = arith.constant 0 : index
    %15 = vector.load %arg7[%c0_11, %c0_12] : memref<16x512xf32, #tpu.memory_space<vmem>>, vector<16x512xf32>
    tpu.vector_store %arg7[%c0_11, %c0_12], %14 {strides = array<i32>} : memref<16x512xf32, #tpu.memory_space<vmem>>, vector<16x512xf32>,
    return
  }
  func.func @transform_0(%arg0: i32, %arg1: i32) -> (i32, i32) {
    %c0_i32 = arith.constant 0 : i32
    %c0_i32_0 = arith.constant 0 : i32
    return %arg0, %c0_i32 : i32, i32
  }
  func.func @transform_1(%arg0: i32, %arg1: i32) -> (i32, i32) {
    %c0_i32 = arith.constant 0 : i32
    %c0_i32_0 = arith.constant 0 : i32
    %c0_i32_1 = arith.constant 0 : i32
    return %c0_i32, %c0_i32_0 : i32, i32
  }
  func.func @transform_2(%arg0: i32, %arg1: i32) -> (i32, i32) {
    %c0_i32 = arith.constant 0 : i32
    %c0_i32_0 = arith.constant 0 : i32
    %c0_i32_1 = arith.constant 0 : i32
    return %c0_i32, %c0_i32_0 : i32, i32
  }
  func.func @transform_3(%arg0: i32, %arg1: i32) -> (i32, i32) {
    %c0_i32 = arith.constant 0 : i32
    %c0_i32_0 = arith.constant 0 : i32
    return %c0_i32, %arg1 : i32, i32
  }
  func.func @transform_4(%arg0: i32, %arg1: i32) -> (i32, i32) {
    %c0_i32 = arith.constant 0 : i32
    %c0_i32_0 = arith.constant 0 : i32
    return %c0_i32, %arg1 : i32, i32
  }
  func.func @transform_5(%arg0: i32, %arg1: i32) -> (i32, i32) {
    %c0_i32 = arith.constant 0 : i32
    return %arg0, %arg1 : i32, i32
  }
}

</mosaic_0001>

<llo_original>
// kernel: tpu_custom_call.1
$region0: #{tpu_custom_call.1}
  #allocation0 [shape = 'u32[]', space=smem, size = 0x4, offset = 0x4, fixed_abs, tag = 'smem constant byte address 0x4 - core index']
  #allocation1 [shape = 'u32[144,128]{1,0:T(1,128)}', space=vmem, size = 0x12000, scoped, tag = 'internal scratch']
  %s0 = inlined_call_operand.hbm [shape: f32[16,1024], index: 0, kind: input, shape index: {}]
  %s1 = inlined_call_operand.hbm [shape: bf16[1024,128], index: 1, kind: input, shape index: {}]
  %s2 = inlined_call_operand.vmem [shape: f32[1,128], index: 2, kind: input, shape index: {}]
  %s3 = inlined_call_operand.hbm [shape: bf16[128,1024], index: 3, kind: input, shape index: {}]
  %s4 = inlined_call_operand.hbm [shape: f32[1,1024], index: 4, kind: input, shape index: {}]
  %s5 = inlined_call_operand.hbm [shape: f32[16,1024], index: 5, kind: output, shape index: {}]
  %s6 = sld [smem:[#allocation0]]
  $region69: #{tpu_custom_call.1} parent=0
    _
  %s8 = ssub.s32 1, %s6
  %s9 = scalar_select 0, %s8, %s6
  $region1: #{tpu_custom_call.1} parent=0
    #allocation2 [shape = 'u8[65536]{0}', space=vmem, size = 0x10000, scoped, tag = 'input window, operand 0, single buffered']
    #allocation3 [shape = 's32[2]{0}', space=sflag, size = 0x8, scoped, tag = 'scoped memory for tpu_custom_call.1']
    #allocation4 [shape = 's32[2]{0}', space=sflag, size = 0x8, scoped, tag = 'scoped memory for tpu_custom_call.1']
    #allocation5 [shape = 'u8[262144]{0}', space=vmem, size = 0x40000, scoped, tag = 'input window, operand 1, single buffered']
    #allocation6 [shape = 's32[1]{0}', space=sflag, size = 0x4, scoped, tag = 'scoped memory for tpu_custom_call.1']
    #allocation7 [shape = 'u8[262144]{0}', space=vmem, size = 0x40000, scoped, tag = 'input window, operand 3']
    #allocation8 [shape = 'u8[4096]{0}', space=vmem, size = 0x1000, scoped, tag = 'input window, operand 4']
    #allocation9 [shape = 'u8[65536]{0}', space=vmem, size = 0x10000, scoped, tag = 'output window, operand 0']
    %10 = vsyncpa [#allocation3], 0
    %11 = vsyncpa [#allocation6], 0
    %12 = vsyncpa [#allocation4], 0
    %s13 = scalar_lea.sflag [#allocation4], 1
    %14 = vsyncpa %s13, 0
    loop: start=0, step=1, limit=4
    $region2: #{tpu_custom_call.1} parent=1 // loop_pre_header
      _
    $region3: #{tpu_custom_call.1} parent=1 // loop_header
      %s16 = sphi 0, %s20
      %p17 = scmp.ge.s32.totalorder %s16, 4
      %s23 = sphi 0, %s35
      %s24 = sphi 0, %s31
      %s25 = sphi 0, %s23
      %s26 = sphi 0, %s24
      %s27 = sphi 0, %s25
      %s28 = sphi 0, %s26
      %s38 = sphi 0, %s40
      %s41 = sphi 0, %s38
      %s42 = sphi 0, %s41
      %s58 = sphi 0, %s42
      %s62 = sphi 0, %s62
      %s64 = sphi 0, %s62
      %s65 = sphi 0, %s64
      %s79 = sphi 0, %s65
      %s83 = sphi 0, %s83
      %s85 = sphi 0, %s83
      %s86 = sphi 0, %s85
      %s100 = sphi 0, %s86
      %s106 = sphi 0, %s108
      %s109 = sphi 0, %s106
      %s110 = sphi 0, %s109
      %s126 = sphi 0, %s110
      %s132 = sphi 0, %s134
      %s135 = sphi 0, %s132
      %s136 = sphi 0, %s135
      %s152 = sphi 0, %s136
      %s160 = sphi 0, %s162
      %s163 = sphi 0, %s160
      %s164 = sphi 0, %s163
      %s180 = sphi 0, %s164
    $region4: #{tpu_custom_call.1} parent=1 // loop_header_branch
      %19 = sbr.rel (%p17) target = $region8
    $region5: #{tpu_custom_call.1} parent=1 // loop_body
      %s21 = ssub.s32 %s16, 1
      %s22 = ssub.s32 %s16, 2
      %s29 = sadd.s32 1, %s24
      %p30 = scmp.ge.s32.totalorder %s29, 2
      %s31 = scalar_select %p30, 0, %s29
      %s32 = sadd.s32 1, %s23
      %s33 = scalar_select %p30, %s32, %s23
      %p34 = scmp.ge.s32.totalorder %s33, 1
      %s35 = scalar_select %p34, 0, %s33
      %s36 = ssub.s32 %s23, %s35
      %p37 = scmp.eq.s32.totalorder %s36, 0
      %s39 = sadd.s32 %s38, 1
      %s40 = scalar_select %p37, %s38, %s39
      %p43 = pneg %p37
      %p44 = scmp.eq.s32.totalorder %s16, 1
      %p45 = por %p43, %p44
      %p46 = scmp.ne.s32.totalorder %s38, %s41
      %p47 = scmp.eq.s32.totalorder %s16, 0
      %p48 = por %p46, %p47
      %p49 = scmp.ne.s32.totalorder %s38, %s41
      %p50 = scmp.eq.s32.totalorder %s21, 1
      %p51 = por %p49, %p50
      %p52 = scmp.ne.s32.totalorder %s41, %s42
      %p53 = scmp.eq.s32.totalorder %s21, 0
      %p54 = por %p52, %p53
      %p55 = scmp.ne.s32.totalorder %s41, %s42
      %p56 = scmp.eq.s32.totalorder %s22, 1
      %p57 = por %p55, %p56
      %p59 = scmp.ne.s32.totalorder %s42, %s58
      %p60 = scmp.eq.s32.totalorder %s22, 0
      %p61 = por %p59, %p60
      %s63 = sadd.s32 %s62, 1
      %p66 = scmp.eq.s32.totalorder %s16, 1
      %p67 = scmp.ne.s32.totalorder %s62, %s64
      %p68 = scmp.eq.s32.totalorder %s16, 0
      %p69 = por %p67, %p68
      %p70 = scmp.ne.s32.totalorder %s62, %s64
      %p71 = scmp.eq.s32.totalorder %s21, 1
      %p72 = por %p70, %p71
      %p73 = scmp.ne.s32.totalorder %s64, %s65
      %p74 = scmp.eq.s32.totalorder %s21, 0
      %p75 = por %p73, %p74
      %p76 = scmp.ne.s32.totalorder %s64, %s65
      %p77 = scmp.eq.s32.totalorder %s22, 1
      %p78 = por %p76, %p77
      %p80 = scmp.ne.s32.totalorder %s65, %s79
      %p81 = scmp.eq.s32.totalorder %s22, 0
      %p82 = por %p80, %p81
      %s84 = sadd.s32 %s83, 1
      %p87 = scmp.eq.s32.totalorder %s16, 1
      %p88 = scmp.ne.s32.totalorder %s83, %s85
      %p89 = scmp.eq.s32.totalorder %s16, 0
      %p90 = por %p88, %p89
      %p91 = scmp.ne.s32.totalorder %s83, %s85
      %p92 = scmp.eq.s32.totalorder %s21, 1
      %p93 = por %p91, %p92
      %p94 = scmp.ne.s32.totalorder %s85, %s86
      %p95 = scmp.eq.s32.totalorder %s21, 0
      %p96 = por %p94, %p95
      %p97 = scmp.ne.s32.totalorder %s85, %s86
      %p98 = scmp.eq.s32.totalorder %s22, 1
      %p99 = por %p97, %p98
      %p101 = scmp.ne.s32.totalorder %s86, %s100
      %p102 = scmp.eq.s32.totalorder %s22, 0
      %p103 = por %p101, %p102
      %s104 = ssub.s32 %s24, %s31
      %p105 = scmp.eq.s32.totalorder %s104, 0
      %s107 = sadd.s32 %s106, 1
      %s108 = scalar_select %p105, %s106, %s107
      %p111 = pneg %p105
      %p112 = scmp.eq.s32.totalorder %s16, 1
      %p113 = por %p111, %p112
      %p114 = scmp.ne.s32.totalorder %s106, %s109
      %p115 = scmp.eq.s32.totalorder %s16, 0
      %p116 = por %p114, %p115
      %p117 = scmp.ne.s32.totalorder %s106, %s109
      %p118 = scmp.eq.s32.totalorder %s21, 1
      %p119 = por %p117, %p118
      %p120 = scmp.ne.s32.totalorder %s109, %s110
      %p121 = scmp.eq.s32.totalorder %s21, 0
      %p122 = por %p120, %p121
      %p123 = scmp.ne.s32.totalorder %s109, %s110
      %p124 = scmp.eq.s32.totalorder %s22, 1
      %p125 = por %p123, %p124
      %p127 = scmp.ne.s32.totalorder %s110, %s126
      %p128 = scmp.eq.s32.totalorder %s22, 0
      %p129 = por %p127, %p128
      %s130 = ssub.s32 %s24, %s31
      %p131 = scmp.eq.s32.totalorder %s130, 0
      %s133 = sadd.s32 %s132, 1
      %s134 = scalar_select %p131, %s132, %s133
      %p137 = pneg %p131
      %p138 = scmp.eq.s32.totalorder %s16, 1
      %p139 = por %p137, %p138
      %p140 = scmp.ne.s32.totalorder %s132, %s135
      %p141 = scmp.eq.s32.totalorder %s16, 0
      %p142 = por %p140, %p141
      %p143 = scmp.ne.s32.totalorder %s132, %s135
      %p144 = scmp.eq.s32.totalorder %s21, 1
      %p145 = por %p143, %p144
      %p146 = scmp.ne.s32.totalorder %s135, %s136
      %p147 = scmp.eq.s32.totalorder %s21, 0
      %p148 = por %p146, %p147
      %p149 = scmp.ne.s32.totalorder %s135, %s136
      %p150 = scmp.eq.s32.totalorder %s22, 1
      %p151 = por %p149, %p150
      %p153 = scmp.ne.s32.totalorder %s136, %s152
      %p154 = scmp.eq.s32.totalorder %s22, 0
      %p155 = por %p153, %p154
      %s156 = ssub.s32 %s23, %s35
      %s157 = ssub.s32 %s24, %s31
      %s158 = sor.u32 %s156, %s157
      %p159 = scmp.eq.s32.totalorder %s158, 0
      %s161 = sadd.s32 %s160, 1
      %s162 = scalar_select %p159, %s160, %s161
      %p165 = pneg %p159
      %p166 = scmp.eq.s32.totalorder %s16, 1
      %p167 = por %p165, %p166
      %p168 = scmp.ne.s32.totalorder %s160, %s163
      %p169 = scmp.eq.s32.totalorder %s16, 0
      %p170 = por %p168, %p169
      %p171 = scmp.ne.s32.totalorder %s160, %s163
      %p172 = scmp.eq.s32.totalorder %s21, 1
      %p173 = por %p171, %p172
      %p174 = scmp.ne.s32.totalorder %s163, %s164
      %p175 = scmp.eq.s32.totalorder %s21, 0
      %p176 = por %p174, %p175
      %p177 = scmp.ne.s32.totalorder %s163, %s164
      %p178 = scmp.eq.s32.totalorder %s22, 1
      %p179 = por %p177, %p178
      %p181 = scmp.ne.s32.totalorder %s164, %s180
      %p182 = scmp.eq.s32.totalorder %s22, 0
      %p183 = por %p181, %p182
      %p184 = scmp.le.s32.totalorder 1, %s16
      %p185 = scmp.lt.s32.totalorder %s16, 3
      %p186 = pnand %p184, %p185
      %p187 = pneg %p186
      // Predicated region
      $region9: #{tpu_custom_call.1} parent=5 // pred_check
        _
      $region10: #{tpu_custom_call.1} parent=5 // pred_check_branch
        %189 = sbr.rel (%p186) target = $region12
      $region11: #{tpu_custom_call.1} parent=5 // pred_region
        %s190 = ssub.s32 %s16, 1
        // Predicated region
        $region13: #{tpu_custom_call.1} parent=11 // pred_check
          %p191 = pneg %p54
        $region14: #{tpu_custom_call.1} parent=11 // pred_check_branch
          %193 = sbr.rel (%p191) target = $region16
        $region15: #{tpu_custom_call.1} parent=11 // pred_region
          %s194 = smul.u32 2, %s25
          %s196 = ssub.s32 2048, 2048
          %197 = vsyncadd [#allocation3], %s196
          %s198 = smul.addr %s194, 8
          %s199 = smul.addr %s198, 128
          %s200 = scalar_lea.hbm %s0, %s199
          %s201 = sshll.u32 [#allocation2], 4
          %s202 = int_to_ptr.vmem [resolvable:$true] %s201
          %207 = dma.hbm_to_vmem [thread:$0]  %s200, 2048, %s202, [#allocation3], 1024, 1024, 64
        $region16: #{tpu_custom_call.1} parent=11 // pred_fallthru
          _
        // Predicated region
        $region17: #{tpu_custom_call.1} parent=11 // pred_check
          %p208 = pneg %p75
        $region18: #{tpu_custom_call.1} parent=11 // pred_check_branch
          %210 = sbr.rel (%p208) target = $region20
        $region19: #{tpu_custom_call.1} parent=11 // pred_region
          %s212 = ssub.s32 8192, 8192
          %213 = vsyncadd [#allocation6], %s212
          %s214 = sshll.u32 [#allocation5], 4
          %s215 = int_to_ptr.vmem [resolvable:$true] %s214
          %220 = dma.hbm_to_vmem [thread:$0]  %s1, 8192, %s215, [#allocation6], 64, 64, 4
        $region20: #{tpu_custom_call.1} parent=11 // pred_fallthru
          _
        // Predicated region
        $region21: #{tpu_custom_call.1} parent=11 // pred_check
          %p221 = pneg %p96
        $region22: #{tpu_custom_call.1} parent=11 // pred_check_branch
          %223 = sbr.rel (%p221) target = $region24
        $region23: #{tpu_custom_call.1} parent=11 // pred_region
          _
        $region24: #{tpu_custom_call.1} parent=11 // pred_fallthru
          _
      $region12: #{tpu_custom_call.1} parent=5 // pred_fallthru
        _
      %p224 = scmp.lt.s32.totalorder %s16, 2
      // Predicated region
      $region25: #{tpu_custom_call.1} parent=5 // pred_check
        %p225 = pneg %p224
      $region26: #{tpu_custom_call.1} parent=5 // pred_check_branch
        %227 = sbr.rel (%p225) target = $region28
      $region27: #{tpu_custom_call.1} parent=5 // pred_region
        // Predicated region
        $region29: #{tpu_custom_call.1} parent=27 // pred_check
          %p228 = pneg %p116
        $region30: #{tpu_custom_call.1} parent=27 // pred_check_branch
          %230 = sbr.rel (%p228) target = $region32
        $region31: #{tpu_custom_call.1} parent=27 // pred_region
          %s231 = sand.u32 %s16, 1
          %s232 = scalar_lea.sflag [#allocation3], %s231
          %s233 = sand.u32 %s106, 1
          %s234 = smul.addr %s233, 256
          %s235 = scalar_lea.vmem [#allocation7], %s234
          %s236 = smul.u32 4, %s24
          %s238 = ssub.s32 4096, 4096
          %239 = vsyncadd %s232, %s238
          %s240 = smul.addr %s236, 64
          %s241 = scalar_lea.hbm %s3, %s240
          %s242 = sshll.u32 %s235, 4
          %s243 = int_to_ptr.vmem [resolvable:$true] %s242
          %248 = dma.hbm_to_vmem [thread:$0]  %s241, 4096, %s243, %s232, 512, 256, 16
        $region32: #{tpu_custom_call.1} parent=27 // pred_fallthru
          _
        // Predicated region
        $region33: #{tpu_custom_call.1} parent=27 // pred_check
          %p249 = pneg %p142
        $region34: #{tpu_custom_call.1} parent=27 // pred_check_branch
          %251 = sbr.rel (%p249) target = $region36
        $region35: #{tpu_custom_call.1} parent=27 // pred_region
          %s252 = sand.u32 %s16, 1
          %s253 = scalar_lea.sflag [#allocation3], %s252
          %s254 = sand.u32 %s132, 1
          %s255 = smul.addr %s254, 4
          %s256 = scalar_lea.vmem [#allocation8], %s255
          %s257 = smul.u32 4, %s24
          %s259 = ssub.s32 64, 64
          %260 = vsyncadd %s253, %s259
          %s261 = smul.addr %s257, 16
          %s262 = scalar_lea.hbm %s4, %s261
          %s264 = sshll.u32 %s256, 4
          %s265 = int_to_ptr.vmem [resolvable:$true] %s264
          %267 = dma.hbm_to_vmem [thread:$0]  %s262, 64, %s265, %s253
        $region36: #{tpu_custom_call.1} parent=27 // pred_fallthru
          _
      $region28: #{tpu_custom_call.1} parent=5 // pred_fallthru
        _
      %p268 = scmp.le.s32.totalorder 1, %s16
      %p269 = scmp.lt.s32.totalorder %s16, 3
      %p270 = pnand %p268, %p269
      %p271 = pneg %p270
      // Predicated region
      $region37: #{tpu_custom_call.1} parent=5 // pred_check
        _
      $region38: #{tpu_custom_call.1} parent=5 // pred_check_branch
        %273 = sbr.rel (%p270) target = $region40
      $region39: #{tpu_custom_call.1} parent=5 // pred_region
        %s274 = ssub.s32 %s16, 1
        // Predicated region
        $region41: #{tpu_custom_call.1} parent=39 // pred_check
          %p275 = pneg %p54
        $region42: #{tpu_custom_call.1} parent=39 // pred_check_branch
          %277 = sbr.rel (%p275) target = $region44
        $region43: #{tpu_custom_call.1} parent=39 // pred_region
          %278 = dma.done [#allocation3], 2048
        $region44: #{tpu_custom_call.1} parent=39 // pred_fallthru
          _
        // Predicated region
        $region45: #{tpu_custom_call.1} parent=39 // pred_check
          %p279 = pneg %p75
        $region46: #{tpu_custom_call.1} parent=39 // pred_check_branch
          %281 = sbr.rel (%p279) target = $region48
        $region47: #{tpu_custom_call.1} parent=39 // pred_region
          %282 = dma.done [#allocation6], 8192
        $region48: #{tpu_custom_call.1} parent=39 // pred_fallthru
          _
        %s283 = sand.u32 %s21, 1
        %s284 = scalar_lea.sflag [#allocation3], %s283
        %s285 = sand.u32 %s109, 1
        %s286 = smul.addr %s285, 256
        %s287 = scalar_lea.vmem [#allocation7], %s286
        // Predicated region
        $region49: #{tpu_custom_call.1} parent=39 // pred_check
          %p288 = pneg %p122
        $region50: #{tpu_custom_call.1} parent=39 // pred_check_branch
          %290 = sbr.rel (%p288) target = $region52
        $region51: #{tpu_custom_call.1} parent=39 // pred_region
          %291 = dma.done %s284, 4096
        $region52: #{tpu_custom_call.1} parent=39 // pred_fallthru
          _
        %s292 = sand.u32 %s21, 1
        %s293 = scalar_lea.sflag [#allocation3], %s292
        %s294 = sand.u32 %s135, 1
        %s295 = smul.addr %s294, 4
        %s296 = scalar_lea.vmem [#allocation8], %s295
        // Predicated region
        $region53: #{tpu_custom_call.1} parent=39 // pred_check
          %p297 = pneg %p148
        $region54: #{tpu_custom_call.1} parent=39 // pred_check_branch
          %299 = sbr.rel (%p297) target = $region56
        $region55: #{tpu_custom_call.1} parent=39 // pred_region
          %300 = dma.done %s293, 64
        $region56: #{tpu_custom_call.1} parent=39 // pred_fallthru
          _
        %p301 = pneg %p54
        %p302 = pneg %p51
        %p303 = pneg %p75
        %p304 = pneg %p72
        %p305 = pneg %p96
        %p306 = pneg %p93
        %s307 = sand.u32 %s21, 1
        %s308 = scalar_lea.sflag [#allocation3], %s307
        %s309 = sand.u32 %s109, 1
        %s310 = smul.addr %s309, 256
        %s311 = scalar_lea.vmem [#allocation7], %s310
        %p312 = pneg %p122
        %p313 = pneg %p119
        %s314 = sand.u32 %s21, 1
        %s315 = scalar_lea.sflag [#allocation3], %s314
        %s316 = sand.u32 %s135, 1
        %s317 = smul.addr %s316, 4
        %s318 = scalar_lea.vmem [#allocation8], %s317
        %p319 = pneg %p148
        %p320 = pneg %p145
        %p321 = pneg %p176
        %p322 = pneg %p173
        %s323 = sand.u32 %s163, 1
        %s324 = scalar_lea.sflag [#allocation4], %s323
        %s325 = sand.u32 %s163, 1
        %s326 = smul.addr %s325, 64
        %s327 = scalar_lea.vmem [#allocation9], %s326
        %s328 = smul.u32 2, %s25
        %s329 = smul.u32 4, %s26
        %s330 = smul.u32 4, %s26
        %s331 = smul.u32 2, %s25
        %s332 = smul.u32 4, %s26
        %v334 = vld [vmem:[#allocation2] sm:$0xff]
        %v335 = vld [vmem:[#allocation2 + $0x8] sm:$0xff]
        %v336 = vld [vmem:[#allocation2 + $0x10] sm:$0xff]
        %v337 = vld [vmem:[#allocation2 + $0x18] sm:$0xff]
        %v338 = vld [vmem:[#allocation2 + $0x20] sm:$0xff]
        %v339 = vld [vmem:[#allocation2 + $0x28] sm:$0xff]
        %v340 = vld [vmem:[#allocation2 + $0x30] sm:$0xff]
        %v341 = vld [vmem:[#allocation2 + $0x38] sm:$0xff]
        %v342 = vld [vmem:[#allocation2 + $0x40] sm:$0xff]
        %v343 = vld [vmem:[#allocation2 + $0x48] sm:$0xff]
        %v344 = vld [vmem:[#allocation2 + $0x50] sm:$0xff]
        %v345 = vld [vmem:[#allocation2 + $0x58] sm:$0xff]
        %v346 = vld [vmem:[#allocation2 + $0x60] sm:$0xff]
        %v347 = vld [vmem:[#allocation2 + $0x68] sm:$0xff]
        %v348 = vld [vmem:[#allocation2 + $0x70] sm:$0xff]
        %v349 = vld [vmem:[#allocation2 + $0x78] sm:$0xff]
        %v350 = vpack.c.bf16 %v342, %v334
        %v351 = vpack.c.bf16 %v343, %v335
        %v352 = vpack.c.bf16 %v344, %v336
        %v353 = vpack.c.bf16 %v345, %v337
        %v354 = vpack.c.bf16 %v346, %v338
        %v355 = vpack.c.bf16 %v347, %v339
        %v356 = vpack.c.bf16 %v348, %v340
        %v357 = vpack.c.bf16 %v349, %v341
        %v358 = vld [vmem:[#allocation5] sm:$0xf]
        %v359 = vld [vmem:[#allocation5 + $0x4] sm:$0xf]
        %v360 = vld [vmem:[#allocation5 + $0x8] sm:$0xf]
        %v361 = vld [vmem:[#allocation5 + $0xc] sm:$0xf]
        %v362 = vld [vmem:[#allocation5 + $0x10] sm:$0xf]
        %v363 = vld [vmem:[#allocation5 + $0x14] sm:$0xf]
        %v364 = vld [vmem:[#allocation5 + $0x18] sm:$0xf]
        %v365 = vld [vmem:[#allocation5 + $0x1c] sm:$0xf]
        %v366 = vld [vmem:[#allocation5 + $0x20] sm:$0xf]
        %v367 = vld [vmem:[#allocation5 + $0x24] sm:$0xf]
        %v368 = vld [vmem:[#allocation5 + $0x28] sm:$0xf]
        %v369 = vld [vmem:[#allocation5 + $0x2c] sm:$0xf]
        %v370 = vld [vmem:[#allocation5 + $0x30] sm:$0xf]
        %v371 = vld [vmem:[#allocation5 + $0x34] sm:$0xf]
        %v372 = vld [vmem:[#allocation5 + $0x38] sm:$0xf]
        %v373 = vld [vmem:[#allocation5 + $0x3c] sm:$0xf]
        %v374 = vld [vmem:[#allocation5 + $0x40] sm:$0xf]
        %v375 = vld [vmem:[#allocation5 + $0x44] sm:$0xf]
        %v376 = vld [vmem:[#allocation5 + $0x48] sm:$0xf]
        %v377 = vld [vmem:[#allocation5 + $0x4c] sm:$0xf]
        %v378 = vld [vmem:[#allocation5 + $0x50] sm:$0xf]
        %v379 = vld [vmem:[#allocation5 + $0x54] sm:$0xf]
        %v380 = vld [vmem:[#allocation5 + $0x58] sm:$0xf]
        %v381 = vld [vmem:[#allocation5 + $0x5c] sm:$0xf]
        %v382 = vld [vmem:[#allocation5 + $0x60] sm:$0xf]
        %v383 = vld [vmem:[#allocation5 + $0x64] sm:$0xf]
        %v384 = vld [vmem:[#allocation5 + $0x68] sm:$0xf]
        %v385 = vld [vmem:[#allocation5 + $0x6c] sm:$0xf]
        %v386 = vld [vmem:[#allocation5 + $0x70] sm:$0xf]
        %v387 = vld [vmem:[#allocation5 + $0x74] sm:$0xf]
        %v388 = vld [vmem:[#allocation5 + $0x78] sm:$0xf]
        %v389 = vld [vmem:[#allocation5 + $0x7c] sm:$0xf]
        %v390 = vld [vmem:[#allocation5 + $0x80] sm:$0xf]
        %v391 = vld [vmem:[#allocation5 + $0x84] sm:$0xf]
        %v392 = vld [vmem:[#allocation5 + $0x88] sm:$0xf]
        %v393 = vld [vmem:[#allocation5 + $0x8c] sm:$0xf]
        %v394 = vld [vmem:[#allocation5 + $0x90] sm:$0xf]
        %v395 = vld [vmem:[#allocation5 + $0x94] sm:$0xf]
        %v396 = vld [vmem:[#allocation5 + $0x98] sm:$0xf]
        %v397 = vld [vmem:[#allocation5 + $0x9c] sm:$0xf]
        %v398 = vld [vmem:[#allocation5 + $0xa0] sm:$0xf]
        %v399 = vld [vmem:[#allocation5 + $0xa4] sm:$0xf]
        %v400 = vld [vmem:[#allocation5 + $0xa8] sm:$0xf]
        %v401 = vld [vmem:[#allocation5 + $0xac] sm:$0xf]
        %v402 = vld [vmem:[#allocation5 + $0xb0] sm:$0xf]
        %v403 = vld [vmem:[#allocation5 + $0xb4] sm:$0xf]
        %v404 = vld [vmem:[#allocation5 + $0xb8] sm:$0xf]
        %v405 = vld [vmem:[#allocation5 + $0xbc] sm:$0xf]
        %v406 = vld [vmem:[#allocation5 + $0xc0] sm:$0xf]
        %v407 = vld [vmem:[#allocation5 + $0xc4] sm:$0xf]
        %v408 = vld [vmem:[#allocation5 + $0xc8] sm:$0xf]
        %v409 = vld [vmem:[#allocation5 + $0xcc] sm:$0xf]
        %v410 = vld [vmem:[#allocation5 + $0xd0] sm:$0xf]
        %v411 = vld [vmem:[#allocation5 + $0xd4] sm:$0xf]
        %v412 = vld [vmem:[#allocation5 + $0xd8] sm:$0xf]
        %v413 = vld [vmem:[#allocation5 + $0xdc] sm:$0xf]
        %v414 = vld [vmem:[#allocation5 + $0xe0] sm:$0xf]
        %v415 = vld [vmem:[#allocation5 + $0xe4] sm:$0xf]
        %v416 = vld [vmem:[#allocation5 + $0xe8] sm:$0xf]
        %v417 = vld [vmem:[#allocation5 + $0xec] sm:$0xf]
        %v418 = vld [vmem:[#allocation5 + $0xf0] sm:$0xf]
        %v419 = vld [vmem:[#allocation5 + $0xf4] sm:$0xf]
        %v420 = vld [vmem:[#allocation5 + $0xf8] sm:$0xf]
        %v421 = vld [vmem:[#allocation5 + $0xfc] sm:$0xf]
        %v422 = vld [vmem:[#allocation5 + $0x100] sm:$0xf]
        %v423 = vld [vmem:[#allocation5 + $0x104] sm:$0xf]
        %v424 = vld [vmem:[#allocation5 + $0x108] sm:$0xf]
        %v425 = vld [vmem:[#allocation5 + $0x10c] sm:$0xf]
        %v426 = vld [vmem:[#allocation5 + $0x110] sm:$0xf]
        %v427 = vld [vmem:[#allocation5 + $0x114] sm:$0xf]
        %v428 = vld [vmem:[#allocation5 + $0x118] sm:$0xf]
        %v429 = vld [vmem:[#allocation5 + $0x11c] sm:$0xf]
        %v430 = vld [vmem:[#allocation5 + $0x120] sm:$0xf]
        %v431 = vld [vmem:[#allocation5 + $0x124] sm:$0xf]
        %v432 = vld [vmem:[#allocation5 + $0x128] sm:$0xf]
        %v433 = vld [vmem:[#allocation5 + $0x12c] sm:$0xf]
        %v434 = vld [vmem:[#allocation5 + $0x130] sm:$0xf]
        %v435 = vld [vmem:[#allocation5 + $0x134] sm:$0xf]
        %v436 = vld [vmem:[#allocation5 + $0x138] sm:$0xf]
        %v437 = vld [vmem:[#allocation5 + $0x13c] sm:$0xf]
        %v438 = vld [vmem:[#allocation5 + $0x140] sm:$0xf]
        %v439 = vld [vmem:[#allocation5 + $0x144] sm:$0xf]
        %v440 = vld [vmem:[#allocation5 + $0x148] sm:$0xf]
        %v441 = vld [vmem:[#allocation5 + $0x14c] sm:$0xf]
        %v442 = vld [vmem:[#allocation5 + $0x150] sm:$0xf]
        %v443 = vld [vmem:[#allocation5 + $0x154] sm:$0xf]
        %v444 = vld [vmem:[#allocation5 + $0x158] sm:$0xf]
        %v445 = vld [vmem:[#allocation5 + $0x15c] sm:$0xf]
        %v446 = vld [vmem:[#allocation5 + $0x160] sm:$0xf]
        %v447 = vld [vmem:[#allocation5 + $0x164] sm:$0xf]
        %v448 = vld [vmem:[#allocation5 + $0x168] sm:$0xf]
        %v449 = vld [vmem:[#allocation5 + $0x16c] sm:$0xf]
        %v450 = vld [vmem:[#allocation5 + $0x170] sm:$0xf]
        %v451 = vld [vmem:[#allocation5 + $0x174] sm:$0xf]
        %v452 = vld [vmem:[#allocation5 + $0x178] sm:$0xf]
        %v453 = vld [vmem:[#allocation5 + $0x17c] sm:$0xf]
        %v454 = vld [vmem:[#allocation5 + $0x180] sm:$0xf]
        %v455 = vld [vmem:[#allocation5 + $0x184] sm:$0xf]
        %v456 = vld [vmem:[#allocation5 + $0x188] sm:$0xf]
        %v457 = vld [vmem:[#allocation5 + $0x18c] sm:$0xf]
        %v458 = vld [vmem:[#allocation5 + $0x190] sm:$0xf]
        %v459 = vld [vmem:[#allocation5 + $0x194] sm:$0xf]
        %v460 = vld [vmem:[#allocation5 + $0x198] sm:$0xf]
        %v461 = vld [vmem:[#allocation5 + $0x19c] sm:$0xf]
        %v462 = vld [vmem:[#allocation5 + $0x1a0] sm:$0xf]
        %v463 = vld [vmem:[#allocation5 + $0x1a4] sm:$0xf]
        %v464 = vld [vmem:[#allocation5 + $0x1a8] sm:$0xf]
        %v465 = vld [vmem:[#allocation5 + $0x1ac] sm:$0xf]
        %v466 = vld [vmem:[#allocation5 + $0x1b0] sm:$0xf]
        %v467 = vld [vmem:[#allocation5 + $0x1b4] sm:$0xf]
        %v468 = vld [vmem:[#allocation5 + $0x1b8] sm:$0xf]
        %v469 = vld [vmem:[#allocation5 + $0x1bc] sm:$0xf]
        %v470 = vld [vmem:[#allocation5 + $0x1c0] sm:$0xf]
        %v471 = vld [vmem:[#allocation5 + $0x1c4] sm:$0xf]
        %v472 = vld [vmem:[#allocation5 + $0x1c8] sm:$0xf]
        %v473 = vld [vmem:[#allocation5 + $0x1cc] sm:$0xf]
        %v474 = vld [vmem:[#allocation5 + $0x1d0] sm:$0xf]
        %v475 = vld [vmem:[#allocation5 + $0x1d4] sm:$0xf]
        %v476 = vld [vmem:[#allocation5 + $0x1d8] sm:$0xf]
        %v477 = vld [vmem:[#allocation5 + $0x1dc] sm:$0xf]
        %v478 = vld [vmem:[#allocation5 + $0x1e0] sm:$0xf]
        %v479 = vld [vmem:[#allocation5 + $0x1e4] sm:$0xf]
        %v480 = vld [vmem:[#allocation5 + $0x1e8] sm:$0xf]
        %v481 = vld [vmem:[#allocation5 + $0x1ec] sm:$0xf]
        %v482 = vld [vmem:[#allocation5 + $0x1f0] sm:$0xf]
        %v483 = vld [vmem:[#allocation5 + $0x1f4] sm:$0xf]
        %v484 = vld [vmem:[#allocation5 + $0x1f8] sm:$0xf]
        %v485 = vld [vmem:[#allocation5 + $0x1fc] sm:$0xf]
        %v486 = vld [vmem:[%s2] sm:$0x1]
        %v488 = vlaneseq
        %v489 = vshrl.u32 %v488, 7
        %v490 = vsub.s32 0, %v489
        %v491 = vrot.slane %v486, %v490
        %v621 = vunpack.c.l.b16 %v358
        %v622 = vunpack.c.l.b16 %v359
        %v623 = vunpack.c.l.b16 %v360
        %v624 = vunpack.c.l.b16 %v361
        %v625 = vunpack.c.l.b16 %v362
        %v626 = vunpack.c.l.b16 %v363
        %v627 = vunpack.c.l.b16 %v364
        %v628 = vunpack.c.l.b16 %v365
        %v629 = vunpack.c.l.b16 %v366
        %v630 = vunpack.c.l.b16 %v367
        %v631 = vunpack.c.l.b16 %v368
        %v632 = vunpack.c.l.b16 %v369
        %v633 = vunpack.c.l.b16 %v370
        %v634 = vunpack.c.l.b16 %v371
        %v635 = vunpack.c.l.b16 %v372
        %v636 = vunpack.c.l.b16 %v373
        %v637 = vunpack.c.l.b16 %v374
        %v638 = vunpack.c.l.b16 %v375
        %v639 = vunpack.c.l.b16 %v376
        %v640 = vunpack.c.l.b16 %v377
        %v641 = vunpack.c.l.b16 %v378
        %v642 = vunpack.c.l.b16 %v379
        %v643 = vunpack.c.l.b16 %v380
        %v644 = vunpack.c.l.b16 %v381
        %v645 = vunpack.c.l.b16 %v382
        %v646 = vunpack.c.l.b16 %v383
        %v647 = vunpack.c.l.b16 %v384
        %v648 = vunpack.c.l.b16 %v385
        %v649 = vunpack.c.l.b16 %v386
        %v650 = vunpack.c.l.b16 %v387
        %v651 = vunpack.c.l.b16 %v388
        %v652 = vunpack.c.l.b16 %v389
        %v653 = vunpack.c.l.b16 %v390
        %v654 = vunpack.c.l.b16 %v391
        %v655 = vunpack.c.l.b16 %v392
        %v656 = vunpack.c.l.b16 %v393
        %v657 = vunpack.c.l.b16 %v394
        %v658 = vunpack.c.l.b16 %v395
        %v659 = vunpack.c.l.b16 %v396
        %v660 = vunpack.c.l.b16 %v397
        %v661 = vunpack.c.l.b16 %v398
        %v662 = vunpack.c.l.b16 %v399
        %v663 = vunpack.c.l.b16 %v400
        %v664 = vunpack.c.l.b16 %v401
        %v665 = vunpack.c.l.b16 %v402
        %v666 = vunpack.c.l.b16 %v403
        %v667 = vunpack.c.l.b16 %v404
        %v668 = vunpack.c.l.b16 %v405
        %v669 = vunpack.c.l.b16 %v406
        %v670 = vunpack.c.l.b16 %v407
        %v671 = vunpack.c.l.b16 %v408
        %v672 = vunpack.c.l.b16 %v409
        %v673 = vunpack.c.l.b16 %v410
        %v674 = vunpack.c.l.b16 %v411
        %v675 = vunpack.c.l.b16 %v412
        %v676 = vunpack.c.l.b16 %v413
        %v677 = vunpack.c.l.b16 %v414
        %v678 = vunpack.c.l.b16 %v415
        %v679 = vunpack.c.l.b16 %v416
        %v680 = vunpack.c.l.b16 %v417
        %v681 = vunpack.c.l.b16 %v418
        %v682 = vunpack.c.l.b16 %v419
        %v683 = vunpack.c.l.b16 %v420
        %v684 = vunpack.c.l.b16 %v421
        %v685 = vunpack.c.l.b16 %v422
        %v686 = vunpack.c.l.b16 %v423
        %v687 = vunpack.c.l.b16 %v424
        %v688 = vunpack.c.l.b16 %v425
        %v689 = vunpack.c.l.b16 %v426
        %v690 = vunpack.c.l.b16 %v427
        %v691 = vunpack.c.l.b16 %v428
        %v692 = vunpack.c.l.b16 %v429
        %v693 = vunpack.c.l.b16 %v430
        %v694 = vunpack.c.l.b16 %v431
        %v695 = vunpack.c.l.b16 %v432
        %v696 = vunpack.c.l.b16 %v433
        %v697 = vunpack.c.l.b16 %v434
        %v698 = vunpack.c.l.b16 %v435
        %v699 = vunpack.c.l.b16 %v436
        %v700 = vunpack.c.l.b16 %v437
        %v701 = vunpack.c.l.b16 %v438
        %v702 = vunpack.c.l.b16 %v439
        %v703 = vunpack.c.l.b16 %v440
        %v704 = vunpack.c.l.b16 %v441
        %v705 = vunpack.c.l.b16 %v442
        %v706 = vunpack.c.l.b16 %v443
        %v707 = vunpack.c.l.b16 %v444
        %v708 = vunpack.c.l.b16 %v445
        %v709 = vunpack.c.l.b16 %v446
        %v710 = vunpack.c.l.b16 %v447
        %v711 = vunpack.c.l.b16 %v448
        %v712 = vunpack.c.l.b16 %v449
        %v713 = vunpack.c.l.b16 %v450
        %v714 = vunpack.c.l.b16 %v451
        %v715 = vunpack.c.l.b16 %v452
        %v716 = vunpack.c.l.b16 %v453
        %v717 = vunpack.c.l.b16 %v454
        %v718 = vunpack.c.l.b16 %v455
        %v719 = vunpack.c.l.b16 %v456
        %v720 = vunpack.c.l.b16 %v457
        %v721 = vunpack.c.l.b16 %v458
        %v722 = vunpack.c.l.b16 %v459
        %v723 = vunpack.c.l.b16 %v460
        %v724 = vunpack.c.l.b16 %v461
        %v725 = vunpack.c.l.b16 %v462
        %v726 = vunpack.c.l.b16 %v463
        %v727 = vunpack.c.l.b16 %v464
        %v728 = vunpack.c.l.b16 %v465
        %v729 = vunpack.c.l.b16 %v466
        %v730 = vunpack.c.l.b16 %v467
        %v731 = vunpack.c.l.b16 %v468
        %v732 = vunpack.c.l.b16 %v469
        %v733 = vunpack.c.l.b16 %v470
        %v734 = vunpack.c.l.b16 %v471
        %v735 = vunpack.c.l.b16 %v472
        %v736 = vunpack.c.l.b16 %v473
        %v737 = vunpack.c.l.b16 %v474
        %v738 = vunpack.c.l.b16 %v475
        %v739 = vunpack.c.l.b16 %v476
        %v740 = vunpack.c.l.b16 %v477
        %v741 = vunpack.c.l.b16 %v478
        %v742 = vunpack.c.l.b16 %v479
        %v743 = vunpack.c.l.b16 %v480
        %v744 = vunpack.c.l.b16 %v481
        %v745 = vunpack.c.l.b16 %v482
        %v746 = vunpack.c.l.b16 %v483
        %v747 = vunpack.c.l.b16 %v484
        %v748 = vunpack.c.l.b16 %v485
        %v749 = vpack.c.b16 %v622, %v621
        %v750 = vpack.c.b16 %v624, %v623
        %v751 = vpack.c.b16 %v626, %v625
        %v752 = vpack.c.b16 %v628, %v627
        %v753 = vpack.c.b16 %v630, %v629
        %v754 = vpack.c.b16 %v632, %v631
        %v755 = vpack.c.b16 %v634, %v633
        %v756 = vpack.c.b16 %v636, %v635
        %v757 = vpack.c.b16 %v638, %v637
        %v758 = vpack.c.b16 %v640, %v639
        %v759 = vpack.c.b16 %v642, %v641
        %v760 = vpack.c.b16 %v644, %v643
        %v761 = vpack.c.b16 %v646, %v645
        %v762 = vpack.c.b16 %v648, %v647
        %v763 = vpack.c.b16 %v650, %v649
        %v764 = vpack.c.b16 %v652, %v651
        %v765 = vpack.c.b16 %v654, %v653
        %v766 = vpack.c.b16 %v656, %v655
        %v767 = vpack.c.b16 %v658, %v657
        %v768 = vpack.c.b16 %v660, %v659
        %v769 = vpack.c.b16 %v662, %v661
        %v770 = vpack.c.b16 %v664, %v663
        %v771 = vpack.c.b16 %v666, %v665
        %v772 = vpack.c.b16 %v668, %v667
        %v773 = vpack.c.b16 %v670, %v669
        %v774 = vpack.c.b16 %v672, %v671
        %v775 = vpack.c.b16 %v674, %v673
        %v776 = vpack.c.b16 %v676, %v675
        %v777 = vpack.c.b16 %v678, %v677
        %v778 = vpack.c.b16 %v680, %v679
        %v779 = vpack.c.b16 %v682, %v681
        %v780 = vpack.c.b16 %v684, %v683
        %v781 = vpack.c.b16 %v686, %v685
        %v782 = vpack.c.b16 %v688, %v687
        %v783 = vpack.c.b16 %v690, %v689
        %v784 = vpack.c.b16 %v692, %v691
        %v785 = vpack.c.b16 %v694, %v693
        %v786 = vpack.c.b16 %v696, %v695
        %v787 = vpack.c.b16 %v698, %v697
        %v788 = vpack.c.b16 %v700, %v699
        %v789 = vpack.c.b16 %v702, %v701
        %v790 = vpack.c.b16 %v704, %v703
        %v791 = vpack.c.b16 %v706, %v705
        %v792 = vpack.c.b16 %v708, %v707
        %v793 = vpack.c.b16 %v710, %v709
        %v794 = vpack.c.b16 %v712, %v711
        %v795 = vpack.c.b16 %v714, %v713
        %v796 = vpack.c.b16 %v716, %v715
        %v797 = vpack.c.b16 %v718, %v717
        %v798 = vpack.c.b16 %v720, %v719
        %v799 = vpack.c.b16 %v722, %v721
        %v800 = vpack.c.b16 %v724, %v723
        %v801 = vpack.c.b16 %v726, %v725
        %v802 = vpack.c.b16 %v728, %v727
        %v803 = vpack.c.b16 %v730, %v729
        %v804 = vpack.c.b16 %v732, %v731
        %v805 = vpack.c.b16 %v734, %v733
        %v806 = vpack.c.b16 %v736, %v735
        %v807 = vpack.c.b16 %v738, %v737
        %v808 = vpack.c.b16 %v740, %v739
        %v809 = vpack.c.b16 %v742, %v741
        %v810 = vpack.c.b16 %v744, %v743
        %v811 = vpack.c.b16 %v746, %v745
        %v812 = vpack.c.b16 %v748, %v747
        %877 = vmatprep.subr.bf16.mxu0 0
        %878 = vmatpush1.bf16.msra.mxu0 %v756
        %879 = vmatprep.subr.bf16.mxu0 0
        %880 = vmatpush1.bf16.msra.mxu0 %v755
        %881 = vmatprep.subr.bf16.mxu0 0
        %882 = vmatpush1.bf16.msra.mxu0 %v754
        %883 = vmatprep.subr.bf16.mxu0 0
        %884 = vmatpush1.bf16.msra.mxu0 %v753
        %885 = vmatprep.subr.bf16.mxu0 0
        %886 = vmatpush1.bf16.msra.mxu0 %v752
        %887 = vmatprep.subr.bf16.mxu0 0
        %888 = vmatpush1.bf16.msra.mxu0 %v751
        %889 = vmatprep.subr.bf16.mxu0 0
        %890 = vmatpush1.bf16.msra.mxu0 %v750
        %891 = vmatprep.subr.bf16.mxu0 0
        %892 = vmatpush1.bf16.msra.mxu0 %v749
        %893 = vmatprep.subr.bf16.mxu0 0
        %894 = vmatpush2.bf16.msra.mxu0 %v764
        %895 = vmatprep.subr.bf16.mxu0 0
        %896 = vmatpush2.bf16.msra.mxu0 %v763
        %897 = vmatprep.subr.bf16.mxu0 0
        %898 = vmatpush2.bf16.msra.mxu0 %v762
        %899 = vmatprep.subr.bf16.mxu0 0
        %900 = vmatpush2.bf16.msra.mxu0 %v761
        %901 = vmatprep.subr.bf16.mxu0 0
        %902 = vmatpush2.bf16.msra.mxu0 %v760
        %903 = vmatprep.subr.bf16.mxu0 0
        %904 = vmatpush2.bf16.msra.mxu0 %v759
        %905 = vmatprep.subr.bf16.mxu0 0
        %906 = vmatpush2.bf16.msra.mxu0 %v758
        %907 = vmatprep.subr.bf16.mxu0 0
        %908 = vmatpush2.bf16.msra.mxu0 %v757
        %909 = vmatprep.mubr.bf16.mxu0 %v351
        %910 = vmatmul.mubr.bf16.gmra.mxu0 %v350
        %v911 = vpop.f32.mrf.mxu0
        %v912 = vadd.f32 %v491, %v911
        %v913 = vpop.f32.mrf.mxu0
        %v914 = vpop.f32.mrf.mxu0
        %v915 = vadd.f32 %v491, %v914
        %v916 = vpop.f32.mrf.mxu0
        %917 = vdwg.mxu0
        %918 = vmatprep.subr.bf16.mxu0 0
        %919 = vmatpush1.bf16.msra.mxu0 %v772
        %920 = vmatprep.subr.bf16.mxu0 0
        %921 = vmatpush1.bf16.msra.mxu0 %v771
        %922 = vmatprep.subr.bf16.mxu0 0
        %923 = vmatpush1.bf16.msra.mxu0 %v770
        %924 = vmatprep.subr.bf16.mxu0 0
        %925 = vmatpush1.bf16.msra.mxu0 %v769
        %926 = vmatprep.subr.bf16.mxu0 0
        %927 = vmatpush1.bf16.msra.mxu0 %v768
        %928 = vmatprep.subr.bf16.mxu0 0
        %929 = vmatpush1.bf16.msra.mxu0 %v767
        %930 = vmatprep.subr.bf16.mxu0 0
        %931 = vmatpush1.bf16.msra.mxu0 %v766
        %932 = vmatprep.subr.bf16.mxu0 0
        %933 = vmatpush1.bf16.msra.mxu0 %v765
        %934 = vmatprep.subr.bf16.mxu0 0
        %935 = vmatpush2.bf16.msra.mxu0 %v780
        %936 = vmatprep.subr.bf16.mxu0 0
        %937 = vmatpush2.bf16.msra.mxu0 %v779
        %938 = vmatprep.subr.bf16.mxu0 0
        %939 = vmatpush2.bf16.msra.mxu0 %v778
        %940 = vmatprep.subr.bf16.mxu0 0
        %941 = vmatpush2.bf16.msra.mxu0 %v777
        %942 = vmatprep.subr.bf16.mxu0 0
        %943 = vmatpush2.bf16.msra.mxu0 %v776
        %944 = vmatprep.subr.bf16.mxu0 0
        %945 = vmatpush2.bf16.msra.mxu0 %v775
        %946 = vmatprep.subr.bf16.mxu0 0
        %947 = vmatpush2.bf16.msra.mxu0 %v774
        %948 = vmatprep.subr.bf16.mxu0 0
        %949 = vmatpush2.bf16.msra.mxu0 %v773
        %950 = vmatprep.mubr.bf16.mxu0 %v353
        %951 = vmatmul.mubr.bf16.gmra.mxu0 %v352
        %v952 = vpop.f32.mrf.mxu0
        %v953 = vadd.f32 %v912, %v952
        %v954 = vpop.f32.mrf.mxu0
        %v955 = vpop.f32.mrf.mxu0
        %v956 = vadd.f32 %v915, %v955
        %v957 = vpop.f32.mrf.mxu0
        %958 = vdwg.mxu0
        %959 = vmatprep.subr.bf16.mxu0 0
        %960 = vmatpush1.bf16.msra.mxu0 %v788
        %961 = vmatprep.subr.bf16.mxu0 0
        %962 = vmatpush1.bf16.msra.mxu0 %v787
        %963 = vmatprep.subr.bf16.mxu0 0
        %964 = vmatpush1.bf16.msra.mxu0 %v786
        %965 = vmatprep.subr.bf16.mxu0 0
        %966 = vmatpush1.bf16.msra.mxu0 %v785
        %967 = vmatprep.subr.bf16.mxu0 0
        %968 = vmatpush1.bf16.msra.mxu0 %v784
        %969 = vmatprep.subr.bf16.mxu0 0
        %970 = vmatpush1.bf16.msra.mxu0 %v783
        %971 = vmatprep.subr.bf16.mxu0 0
        %972 = vmatpush1.bf16.msra.mxu0 %v782
        %973 = vmatprep.subr.bf16.mxu0 0
        %974 = vmatpush1.bf16.msra.mxu0 %v781
        %975 = vmatprep.subr.bf16.mxu0 0
        %976 = vmatpush2.bf16.msra.mxu0 %v796
        %977 = vmatprep.subr.bf16.mxu0 0
        %978 = vmatpush2.bf16.msra.mxu0 %v795
        %979 = vmatprep.subr.bf16.mxu0 0
        %980 = vmatpush2.bf16.msra.mxu0 %v794
        %981 = vmatprep.subr.bf16.mxu0 0
        %982 = vmatpush2.bf16.msra.mxu0 %v793
        %983 = vmatprep.subr.bf16.mxu0 0
        %984 = vmatpush2.bf16.msra.mxu0 %v792
        %985 = vmatprep.subr.bf16.mxu0 0
        %986 = vmatpush2.bf16.msra.mxu0 %v791
        %987 = vmatprep.subr.bf16.mxu0 0
        %988 = vmatpush2.bf16.msra.mxu0 %v790
        %989 = vmatprep.subr.bf16.mxu0 0
        %990 = vmatpush2.bf16.msra.mxu0 %v789
        %991 = vmatprep.mubr.bf16.mxu0 %v355
        %992 = vmatmul.mubr.bf16.gmra.mxu0 %v354
        %v993 = vpop.f32.mrf.mxu0
        %v994 = vadd.f32 %v953, %v993
        %v995 = vpop.f32.mrf.mxu0
        %v996 = vpop.f32.mrf.mxu0
        %v997 = vadd.f32 %v956, %v996
        %v998 = vpop.f32.mrf.mxu0
        %999 = vdwg.mxu0
        %1000 = vmatprep.subr.bf16.mxu0 0
        %1001 = vmatpush1.bf16.msra.mxu0 %v804
        %1002 = vmatprep.subr.bf16.mxu0 0
        %1003 = vmatpush1.bf16.msra.mxu0 %v803
        %1004 = vmatprep.subr.bf16.mxu0 0
        %1005 = vmatpush1.bf16.msra.mxu0 %v802
        %1006 = vmatprep.subr.bf16.mxu0 0
        %1007 = vmatpush1.bf16.msra.mxu0 %v801
        %1008 = vmatprep.subr.bf16.mxu0 0
        %1009 = vmatpush1.bf16.msra.mxu0 %v800
        %1010 = vmatprep.subr.bf16.mxu0 0
        %1011 = vmatpush1.bf16.msra.mxu0 %v799
        %1012 = vmatprep.subr.bf16.mxu0 0
        %1013 = vmatpush1.bf16.msra.mxu0 %v798
        %1014 = vmatprep.subr.bf16.mxu0 0
        %1015 = vmatpush1.bf16.msra.mxu0 %v797
        %1016 = vmatprep.subr.bf16.mxu0 0
        %1017 = vmatpush2.bf16.msra.mxu0 %v812
        %1018 = vmatprep.subr.bf16.mxu0 0
        %1019 = vmatpush2.bf16.msra.mxu0 %v811
        %1020 = vmatprep.subr.bf16.mxu0 0
        %1021 = vmatpush2.bf16.msra.mxu0 %v810
        %1022 = vmatprep.subr.bf16.mxu0 0
        %1023 = vmatpush2.bf16.msra.mxu0 %v809
        %1024 = vmatprep.subr.bf16.mxu0 0
        %1025 = vmatpush2.bf16.msra.mxu0 %v808
        %1026 = vmatprep.subr.bf16.mxu0 0
        %1027 = vmatpush2.bf16.msra.mxu0 %v807
        %1028 = vmatprep.subr.bf16.mxu0 0
        %1029 = vmatpush2.bf16.msra.mxu0 %v806
        %1030 = vmatprep.subr.bf16.mxu0 0
        %1031 = vmatpush2.bf16.msra.mxu0 %v805
        %1032 = vmatprep.mubr.bf16.mxu0 %v357
        %1033 = vmatmul.mubr.bf16.gmra.mxu0 %v356
        %v1034 = vpop.f32.mrf.mxu0
        %v1035 = vadd.f32 %v994, %v1034
        %v1036 = vpop.f32.mrf.mxu0
        %v1037 = vpop.f32.mrf.mxu0
        %v1038 = vadd.f32 %v997, %v1037
        %v1039 = vpop.f32.mrf.mxu0
        %1040 = vdwg.mxu0
        %v1041 = vmax.f32 %v1035, 0.0
        %v1042 = vmax.f32 %v1038, 0.0
        %v1043 = vpack.c.bf16 %v1042, %v1041
        %v1044 = vld [vmem:[%s287] sm:$0xff]
        %v1045 = vld [vmem:[%s287 + $0x8] sm:$0xff]
        %v1046 = vld [vmem:[%s287 + $0x10] sm:$0xff]
        %v1047 = vld [vmem:[%s287 + $0x18] sm:$0xff]
        %v1048 = vld [vmem:[%s287 + $0x20] sm:$0xff]
        %v1049 = vld [vmem:[%s287 + $0x28] sm:$0xff]
        %v1050 = vld [vmem:[%s287 + $0x30] sm:$0xff]
        %v1051 = vld [vmem:[%s287 + $0x38] sm:$0xff]
        %v1052 = vld [vmem:[%s287 + $0x40] sm:$0xff]
        %v1053 = vld [vmem:[%s287 + $0x48] sm:$0xff]
        %v1054 = vld [vmem:[%s287 + $0x50] sm:$0xff]
        %v1055 = vld [vmem:[%s287 + $0x58] sm:$0xff]
        %v1056 = vld [vmem:[%s287 + $0x60] sm:$0xff]
        %v1057 = vld [vmem:[%s287 + $0x68] sm:$0xff]
        %v1058 = vld [vmem:[%s287 + $0x70] sm:$0xff]
        %v1059 = vld [vmem:[%s287 + $0x78] sm:$0xff]
        %v1060 = vld [vmem:[%s287 + $0x80] sm:$0xff]
        %v1061 = vld [vmem:[%s287 + $0x88] sm:$0xff]
        %v1062 = vld [vmem:[%s287 + $0x90] sm:$0xff]
        %v1063 = vld [vmem:[%s287 + $0x98] sm:$0xff]
        %v1064 = vld [vmem:[%s287 + $0xa0] sm:$0xff]
        %v1065 = vld [vmem:[%s287 + $0xa8] sm:$0xff]
        %v1066 = vld [vmem:[%s287 + $0xb0] sm:$0xff]
        %v1067 = vld [vmem:[%s287 + $0xb8] sm:$0xff]
        %v1068 = vld [vmem:[%s287 + $0xc0] sm:$0xff]
        %v1069 = vld [vmem:[%s287 + $0xc8] sm:$0xff]
        %v1070 = vld [vmem:[%s287 + $0xd0] sm:$0xff]
        %v1071 = vld [vmem:[%s287 + $0xd8] sm:$0xff]
        %v1072 = vld [vmem:[%s287 + $0xe0] sm:$0xff]
        %v1073 = vld [vmem:[%s287 + $0xe8] sm:$0xff]
        %v1074 = vld [vmem:[%s287 + $0xf0] sm:$0xff]
        %v1075 = vld [vmem:[%s287 + $0xf8] sm:$0xff]
        %v1076 = vld [vmem:[%s296] sm:$0xf]
        %v1078 = vlaneseq
        %v1079 = vshrl.u32 %v1078, 7
        %v1080 = vsub.s32 0, %v1079
        %v1081 = vrot.slane %v1076, %v1080
        %v1082 = vlaneseq
        %v1083 = vshrl.u32 %v1082, 7
        %v1084 = vsub.s32 1, %v1083
        %v1085 = vrot.slane %v1076, %v1084
        %v1086 = vlaneseq
        %v1087 = vshrl.u32 %v1086, 7
        %v1088 = vsub.s32 2, %v1087
        %v1089 = vrot.slane %v1076, %v1088
        %v1090 = vlaneseq
        %v1091 = vshrl.u32 %v1090, 7
        %v1092 = vsub.s32 3, %v1091
        %v1093 = vrot.slane %v1076, %v1092
        %v1130 = vunpack.c.l.b16 %v1044
        %v1131 = vunpack.c.h.b16 %v1044
        %v1132 = vunpack.c.l.b16 %v1045
        %v1133 = vunpack.c.h.b16 %v1045
        %v1134 = vunpack.c.l.b16 %v1046
        %v1135 = vunpack.c.h.b16 %v1046
        %v1136 = vunpack.c.l.b16 %v1047
        %v1137 = vunpack.c.h.b16 %v1047
        %v1138 = vunpack.c.l.b16 %v1048
        %v1139 = vunpack.c.h.b16 %v1048
        %v1140 = vunpack.c.l.b16 %v1049
        %v1141 = vunpack.c.h.b16 %v1049
        %v1142 = vunpack.c.l.b16 %v1050
        %v1143 = vunpack.c.h.b16 %v1050
        %v1144 = vunpack.c.l.b16 %v1051
        %v1145 = vunpack.c.h.b16 %v1051
        %v1146 = vunpack.c.l.b16 %v1052
        %v1147 = vunpack.c.h.b16 %v1052
        %v1148 = vunpack.c.l.b16 %v1053
        %v1149 = vunpack.c.h.b16 %v1053
        %v1150 = vunpack.c.l.b16 %v1054
        %v1151 = vunpack.c.h.b16 %v1054
        %v1152 = vunpack.c.l.b16 %v1055
        %v1153 = vunpack.c.h.b16 %v1055
        %v1154 = vunpack.c.l.b16 %v1056
        %v1155 = vunpack.c.h.b16 %v1056
        %v1156 = vunpack.c.l.b16 %v1057
        %v1157 = vunpack.c.h.b16 %v1057
        %v1158 = vunpack.c.l.b16 %v1058
        %v1159 = vunpack.c.h.b16 %v1058
        %v1160 = vunpack.c.l.b16 %v1059
        %v1161 = vunpack.c.h.b16 %v1059
        %v1162 = vunpack.c.l.b16 %v1060
        %v1163 = vunpack.c.h.b16 %v1060
        %v1164 = vunpack.c.l.b16 %v1061
        %v1165 = vunpack.c.h.b16 %v1061
        %v1166 = vunpack.c.l.b16 %v1062
        %v1167 = vunpack.c.h.b16 %v1062
        %v1168 = vunpack.c.l.b16 %v1063
        %v1169 = vunpack.c.h.b16 %v1063
        %v1170 = vunpack.c.l.b16 %v1064
        %v1171 = vunpack.c.h.b16 %v1064
        %v1172 = vunpack.c.l.b16 %v1065
        %v1173 = vunpack.c.h.b16 %v1065
        %v1174 = vunpack.c.l.b16 %v1066
        %v1175 = vunpack.c.h.b16 %v1066
        %v1176 = vunpack.c.l.b16 %v1067
        %v1177 = vunpack.c.h.b16 %v1067
        %v1178 = vunpack.c.l.b16 %v1068
        %v1179 = vunpack.c.h.b16 %v1068
        %v1180 = vunpack.c.l.b16 %v1069
        %v1181 = vunpack.c.h.b16 %v1069
        %v1182 = vunpack.c.l.b16 %v1070
        %v1183 = vunpack.c.h.b16 %v1070
        %v1184 = vunpack.c.l.b16 %v1071
        %v1185 = vunpack.c.h.b16 %v1071
        %v1186 = vunpack.c.l.b16 %v1072
        %v1187 = vunpack.c.h.b16 %v1072
        %v1188 = vunpack.c.l.b16 %v1073
        %v1189 = vunpack.c.h.b16 %v1073
        %v1190 = vunpack.c.l.b16 %v1074
        %v1191 = vunpack.c.h.b16 %v1074
        %v1192 = vunpack.c.l.b16 %v1075
        %v1193 = vunpack.c.h.b16 %v1075
        %v1194 = vpack.c.b16 %v1134, %v1130
        %v1195 = vpack.c.b16 %v1135, %v1131
        %v1196 = vpack.c.b16 %v1136, %v1132
        %v1197 = vpack.c.b16 %v1137, %v1133
        %v1198 = vpack.c.b16 %v1142, %v1138
        %v1199 = vpack.c.b16 %v1143, %v1139
        %v1200 = vpack.c.b16 %v1144, %v1140
        %v1201 = vpack.c.b16 %v1145, %v1141
        %v1202 = vpack.c.b16 %v1150, %v1146
        %v1203 = vpack.c.b16 %v1151, %v1147
        %v1204 = vpack.c.b16 %v1152, %v1148
        %v1205 = vpack.c.b16 %v1153, %v1149
        %v1206 = vpack.c.b16 %v1158, %v1154
        %v1207 = vpack.c.b16 %v1159, %v1155
        %v1208 = vpack.c.b16 %v1160, %v1156
        %v1209 = vpack.c.b16 %v1161, %v1157
        %v1210 = vpack.c.b16 %v1166, %v1162
        %v1211 = vpack.c.b16 %v1167, %v1163
        %v1212 = vpack.c.b16 %v1168, %v1164
        %v1213 = vpack.c.b16 %v1169, %v1165
        %v1214 = vpack.c.b16 %v1174, %v1170
        %v1215 = vpack.c.b16 %v1175, %v1171
        %v1216 = vpack.c.b16 %v1176, %v1172
        %v1217 = vpack.c.b16 %v1177, %v1173
        %v1218 = vpack.c.b16 %v1182, %v1178
        %v1219 = vpack.c.b16 %v1183, %v1179
        %v1220 = vpack.c.b16 %v1184, %v1180
        %v1221 = vpack.c.b16 %v1185, %v1181
        %v1222 = vpack.c.b16 %v1190, %v1186
        %v1223 = vpack.c.b16 %v1191, %v1187
        %v1224 = vpack.c.b16 %v1192, %v1188
        %v1225 = vpack.c.b16 %v1193, %v1189
        %1258 = vmatprep.subr.bf16.mxu0 %v1223
        %1259 = vmatpush1.bf16.msra.mxu0 %v1222
        %1260 = vmatprep.subr.bf16.mxu0 %v1219
        %1261 = vmatpush1.bf16.msra.mxu0 %v1218
        %1262 = vmatprep.subr.bf16.mxu0 %v1215
        %1263 = vmatpush1.bf16.msra.mxu0 %v1214
        %1264 = vmatprep.subr.bf16.mxu0 %v1211
        %1265 = vmatpush1.bf16.msra.mxu0 %v1210
        %1266 = vmatprep.subr.bf16.mxu0 %v1207
        %1267 = vmatpush1.bf16.msra.mxu0 %v1206
        %1268 = vmatprep.subr.bf16.mxu0 %v1203
        %1269 = vmatpush1.bf16.msra.mxu0 %v1202
        %1270 = vmatprep.subr.bf16.mxu0 %v1199
        %1271 = vmatpush1.bf16.msra.mxu0 %v1198
        %1272 = vmatprep.subr.bf16.mxu0 %v1195
        %1273 = vmatpush1.bf16.msra.mxu0 %v1194
        %1274 = vmatprep.subr.bf16.mxu0 0
        %1275 = vmatpush2.bf16.msra.mxu0 0
        %1276 = vmatprep.subr.bf16.mxu0 0
        %1277 = vmatpush2.bf16.msra.mxu0 0
        %1278 = vmatprep.subr.bf16.mxu0 0
        %1279 = vmatpush2.bf16.msra.mxu0 0
        %1280 = vmatprep.subr.bf16.mxu0 0
        %1281 = vmatpush2.bf16.msra.mxu0 0
        %1282 = vmatprep.subr.bf16.mxu0 0
        %1283 = vmatpush2.bf16.msra.mxu0 0
        %1284 = vmatprep.subr.bf16.mxu0 0
        %1285 = vmatpush2.bf16.msra.mxu0 0
        %1286 = vmatprep.subr.bf16.mxu0 0
        %1287 = vmatpush2.bf16.msra.mxu0 0
        %1288 = vmatprep.subr.bf16.mxu0 0
        %1289 = vmatpush2.bf16.msra.mxu0 0
        %1290 = vmatprep.mubr.bf16.mxu0 0
        %1291 = vmatmul.mubr.bf16.gmra.mxu0 %v1043
        %v1292 = vpop.f32.mrf.mxu0
        %v1293 = vadd.f32 %v1081, %v1292
        %v1294 = vpop.f32.mrf.mxu0
        %v1295 = vadd.f32 %v1085, %v1294
        %v1296 = vpop.f32.mrf.mxu0
        %v1297 = vadd.f32 %v1081, %v1296
        %v1298 = vpop.f32.mrf.mxu0
        %v1299 = vadd.f32 %v1085, %v1298
        %1300 = vdwg.mxu0
        %1301 = vmatprep.subr.bf16.mxu0 %v1225
        %1302 = vmatpush1.bf16.msra.mxu0 %v1224
        %1303 = vmatprep.subr.bf16.mxu0 %v1221
        %1304 = vmatpush1.bf16.msra.mxu0 %v1220
        %1305 = vmatprep.subr.bf16.mxu0 %v1217
        %1306 = vmatpush1.bf16.msra.mxu0 %v1216
        %1307 = vmatprep.subr.bf16.mxu0 %v1213
        %1308 = vmatpush1.bf16.msra.mxu0 %v1212
        %1309 = vmatprep.subr.bf16.mxu0 %v1209
        %1310 = vmatpush1.bf16.msra.mxu0 %v1208
        %1311 = vmatprep.subr.bf16.mxu0 %v1205
        %1312 = vmatpush1.bf16.msra.mxu0 %v1204
        %1313 = vmatprep.subr.bf16.mxu0 %v1201
        %1314 = vmatpush1.bf16.msra.mxu0 %v1200
        %1315 = vmatprep.subr.bf16.mxu0 %v1197
        %1316 = vmatpush1.bf16.msra.mxu0 %v1196
        %1317 = vmatprep.subr.bf16.mxu0 0
        %1318 = vmatpush2.bf16.msra.mxu0 0
        %1319 = vmatprep.subr.bf16.mxu0 0
        %1320 = vmatpush2.bf16.msra.mxu0 0
        %1321 = vmatprep.subr.bf16.mxu0 0
        %1322 = vmatpush2.bf16.msra.mxu0 0
        %1323 = vmatprep.subr.bf16.mxu0 0
        %1324 = vmatpush2.bf16.msra.mxu0 0
        %1325 = vmatprep.subr.bf16.mxu0 0
        %1326 = vmatpush2.bf16.msra.mxu0 0
        %1327 = vmatprep.subr.bf16.mxu0 0
        %1328 = vmatpush2.bf16.msra.mxu0 0
        %1329 = vmatprep.subr.bf16.mxu0 0
        %1330 = vmatpush2.bf16.msra.mxu0 0
        %1331 = vmatprep.subr.bf16.mxu0 0
        %1332 = vmatpush2.bf16.msra.mxu0 0
        %1333 = vmatprep.mubr.bf16.mxu0 0
        %1334 = vmatmul.mubr.bf16.gmra.mxu0 %v1043
        %v1335 = vpop.f32.mrf.mxu0
        %v1336 = vadd.f32 %v1089, %v1335
        %v1337 = vpop.f32.mrf.mxu0
        %v1338 = vadd.f32 %v1093, %v1337
        %v1339 = vpop.f32.mrf.mxu0
        %v1340 = vadd.f32 %v1089, %v1339
        %v1341 = vpop.f32.mrf.mxu0
        %v1342 = vadd.f32 %v1093, %v1341
        %1343 = vdwg.mxu0
        %1344 = vst [vmem:[%s327] sm:$0xff] %v1293
        %1345 = vst [vmem:[%s327 + $0x8] sm:$0xff] %v1295
        %1346 = vst [vmem:[%s327 + $0x10] sm:$0xff] %v1336
        %1347 = vst [vmem:[%s327 + $0x18] sm:$0xff] %v1338
        %1348 = vst [vmem:[%s327 + $0x20] sm:$0xff] %v1297
        %1349 = vst [vmem:[%s327 + $0x28] sm:$0xff] %v1299
        %1350 = vst [vmem:[%s327 + $0x30] sm:$0xff] %v1340
        %1351 = vst [vmem:[%s327 + $0x38] sm:$0xff] %v1342
        %s1352 = sand.u32 %s163, 1
        %s1353 = scalar_lea.sflag [#allocation4], %s1352
        %s1354 = sand.u32 %s163, 1
        %s1355 = smul.addr %s1354, 64
        %s1356 = scalar_lea.vmem [#allocation9], %s1355
        // Predicated region
        $region57: #{tpu_custom_call.1} parent=39 // pred_check
          %p1357 = pneg %p173
        $region58: #{tpu_custom_call.1} parent=39 // pred_check_branch
          %1359 = sbr.rel (%p1357) target = $region60
        $region59: #{tpu_custom_call.1} parent=39 // pred_region
          %s1360 = smul.u32 2, %s25
          %s1361 = smul.u32 4, %s26
          %s1363 = ssub.s32 1024, 1024
          %1364 = vsyncadd %s1353, %s1363
          %s1365 = smul.addr %s1360, 8
          %s1366 = sadd.s32 %s1361, %s1365
          %s1367 = smul.addr %s1366, 128
          %s1368 = scalar_lea.hbm %s5, %s1367
          %s1369 = sshll.u32 %s1356, 4
          %s1370 = int_to_ptr.vmem [resolvable:$true] %s1369
          %1375 = dma.vmem_to_hbm [thread:$0]  %s1370, 1024, %s1368, %s1353, 512, 1024, 32
        $region60: #{tpu_custom_call.1} parent=39 // pred_fallthru
          _
      $region40: #{tpu_custom_call.1} parent=5 // pred_fallthru
        _
      %p1376 = scmp.le.s32.totalorder 2, %s16
      // Predicated region
      $region61: #{tpu_custom_call.1} parent=5 // pred_check
        %p1377 = pneg %p1376
      $region62: #{tpu_custom_call.1} parent=5 // pred_check_branch
        %1379 = sbr.rel (%p1377) target = $region64
      $region63: #{tpu_custom_call.1} parent=5 // pred_region
        %s1380 = ssub.s32 %s16, 2
        // Predicated region
        $region65: #{tpu_custom_call.1} parent=63 // pred_check
          %p1381 = pneg %p179
        $region66: #{tpu_custom_call.1} parent=63 // pred_check_branch
          %1383 = sbr.rel (%p1381) target = $region68
        $region67: #{tpu_custom_call.1} parent=63 // pred_region
          %s1384 = sand.u32 %s164, 1
          %s1385 = scalar_lea.sflag [#allocation4], %s1384
          %s1386 = sand.u32 %s164, 1
          %s1387 = smul.addr %s1386, 64
          %s1388 = scalar_lea.vmem [#allocation9], %s1387
          %1389 = dma.done %s1385, 1024
        $region68: #{tpu_custom_call.1} parent=63 // pred_fallthru
          _
      $region64: #{tpu_custom_call.1} parent=5 // pred_fallthru
        _
    $region6: #{tpu_custom_call.1} parent=1 // loop_footer
      %s20 = sadd.s32 1, %s16
    $region7: #{tpu_custom_call.1} parent=1 // loop_footer_branch
      %15 = sbr.rel target = $region3
    $region8: #{tpu_custom_call.1} parent=1 // loop_exit
      _
    %1390 = vsyncpa [#allocation3], 1
    %s1391 = scalar_lea.sflag [#allocation3], 1
    %1392 = vsyncpa %s1391, 1
    %1393 = vsyncpa [#allocation6], 1
    %1394 = vsyncpa [#allocation4], 1
    %s1395 = scalar_lea.sflag [#allocation4], 1
    %1396 = vsyncpa %s1395, 1

</llo_original>
